<compile_context>
chip_gen: v6e
topology: v6e:2x2x1
jax: 0.10.0
libtpu: 0.0.40
codegen_flags: <defaults>
</compile_context>

<pallas_src>
import functools

import jax
import jax.numpy as jnp
from jax import lax
from jax.experimental import pallas as pl
from jax.experimental.pallas import tpu as pltpu


def _round_up(x: int, m: int) -> int:
    return (x + m - 1) // m * m


def _make_xent_kernel(num_valid: int, block_rows: int):
    """Kernel factory: accumulates sum-of-NLL over batch blocks, emits the mean."""

    def kernel(logits_ref, targets_ref, out_ref):
        i = pl.program_id(0)

        @pl.when(i == 0)
        def _init():
            out_ref[...] = jnp.zeros_like(out_ref)

        # Upcast in-kernel: inputs travel HBM->VMEM in their native (e.g. bf16) dtype.
        x = logits_ref[...].astype(jnp.float32)                  # (TB, C)
        t = targets_ref[...]                                     # (TB, 1) int32

        # Numerically stable cross-entropy, reusing the shifted tensor (x - m):
        #   nll[b] = log(sum_c exp(x[b,c] - m[b])) - (x[b, t[b]] - m[b])
        m = jnp.max(x, axis=-1, keepdims=True)                   # (TB, 1)  XLU reduce
        xs = x - m                                               # (TB, C)  VPU
        denom = jnp.sum(jnp.exp(xs), axis=-1, keepdims=True)     # EUP exp + XLU reduce

        # Gather the shifted target logit via an iota==target mask-sum (VPU/XLU; no MXU).
        cls = lax.broadcasted_iota(jnp.int32, x.shape, 1)        # (TB, C)
        tgt = jnp.sum(jnp.where(cls == t, xs, 0.0), axis=-1, keepdims=True)

        nll = jnp.log(denom) - tgt                               # (TB, 1)

        # Zero out rows that are batch padding (when B is not a multiple of TB).
        row = lax.broadcasted_iota(jnp.int32, nll.shape, 0) + i * block_rows
        nll = jnp.where(row < num_valid, nll, 0.0)

        out_ref[...] += jnp.sum(nll, keepdims=True)              # (1, 1) accumulate

        @pl.when(i == pl.num_programs(0) - 1)
        def _finalize():
            # Emit the mean directly (CrossEntropyLoss reduction='mean').
            out_ref[...] = out_ref[...] * jnp.float32(1.0 / num_valid)

    return kernel


@functools.partial(jax.jit, static_argnames=("block_rows",))
def criterion_forward(logits, cosine_logits, targets, *, block_rows=512):
    """Mirrors Criterion.forward: returns (total_loss, {'xe': xe})."""
    del cosine_logits  # unused by forward() in the reference module
    b, c = logits.shape

    # Batch tile: a multiple of 8 sublanes; the modest default keeps the double-buffered
    # (TB, C) input blocks well under the scoped-VMEM defaults on v5e/v6e/v7x.
    tb = min(block_rows, _round_up(b, 8))
    b_pad = _round_up(b, tb)

    targets = targets.astype(jnp.int32)
    if b_pad != b:
        logits = jnp.pad(logits, ((0, b_pad - b), (0, 0)))
        targets = jnp.pad(targets, (0, b_pad - b))
    targets = targets.reshape(b_pad, 1)

    out = pl.pallas_call(
        _make_xent_kernel(num_valid=b, block_rows=tb),
        out_shape=jax.ShapeDtypeStruct((1, 1), jnp.float32),
        grid_spec=pltpu.PrefetchScalarGridSpec(
            num_scalar_prefetch=0,
            grid=(b_pad // tb,),
            in_specs=[
                pl.BlockSpec((tb, c), lambda i: (i, 0)),    # logits (native dtype)
                pl.BlockSpec((tb, 1), lambda i: (i, 0)),    # targets (int32)
            ],
            # Same (1, 1) block every step -> VMEM-resident accumulator output.
            out_specs=pl.BlockSpec((1, 1), lambda i: (0, 0)),
        ),
        compiler_params=pltpu.CompilerParams(
            # Accumulator output across the batch axis -> reduction axis -> "arbitrary".
            dimension_semantics=("arbitrary",),
        ),
    )(logits, targets)

    xe = out[0, 0]
    loss_dict = {"xe": xe}
    total = xe  # sum(loss_dict.values()) — only "xe" is present in forward()
    return total, loss_dict


def reference_xe(logits, targets):
    """Pure-JAX reference of torch.nn.CrossEntropyLoss (mean reduction)."""
    logp = jax.nn.log_softmax(logits.astype(jnp.float32), axis=-1)
    nll = -jnp.take_along_axis(logp, targets[:, None].astype(jnp.int32), axis=-1)[:, 0]
    return jnp.mean(nll)


if __name__ == "__main__":
    NUM_CLASSES = 200   # module default num_classes
    K = 3               # prototypes per class -> cosine_logits has NUM_CLASSES * K cols
    B = 8               # batch

    key = jax.random.PRNGKey(0)
    k1, k2, k3 = jax.random.split(key, 3)
    logits = jax.random.normal(k1, (B, NUM_CLASSES), jnp.bfloat16)       # native bf16
    cosine_logits = jax.random.normal(k2, (B, NUM_CLASSES * K), jnp.bfloat16)
    targets = jax.random.randint(k3, (B,), 0, NUM_CLASSES, jnp.int32)

    total, loss_dict = criterion_forward(logits, cosine_logits, targets)
    total = jax.block_until_ready(total)

    ref = reference_xe(logits, targets)
    assert jnp.allclose(total, ref, atol=1e-4, rtol=1e-4), (float(total), float(ref))
    assert jnp.allclose(loss_dict["xe"], ref, atol=1e-4, rtol=1e-4)

    print("KERNEL_OK")
</pallas_src>

<mosaic_0001>
module attributes {stable_mosaic.version = 11 : i64} {
  func.func @kernel(%arg0: i32, %arg1: memref<8x200xbf16, #tpu.memory_space<vmem>>, %arg2: memref<8x1xi32, #tpu.memory_space<vmem>>, %arg3: memref<1x1xf32, #tpu.memory_space<vmem>>) attributes {dimension_semantics = [#tpu.dimension_semantics<arbitrary>], iteration_bounds = array<i64: 1>, scalar_prefetch = 0 : i64, scratch_operands = 0 : i64, tpu.core_type = #tpu.core_type<tc>, window_params = [{transform_indices = @transform_0, window_bounds = array<i64: 8, 200>}, {transform_indices = @transform_1, window_bounds = array<i64: 8, 1>}, {pipeline_mode = #tpu.pipeline_mode<synchronous>, transform_indices = @transform_2, window_bounds = array<i64: 1, 1>}]} {
    %c0_i32 = arith.constant 0 : i32
    %0 = arith.cmpi eq, %arg0, %c0_i32 : i32
    %1 = arith.extui %0 : i1 to i32
    %c0_i32_0 = arith.constant 0 : i32
    %2 = arith.cmpi ne, %1, %c0_i32_0 : i32
    scf.if %2 {
      %cst_16 = arith.constant 0.000000e+00 : f32
      %41 = vector.broadcast %cst_16 : f32 to vector<1x1xf32>
      %c0_17 = arith.constant 0 : index
      %c0_18 = arith.constant 0 : index
      %42 = vector.load %arg3[%c0_17, %c0_18] : memref<1x1xf32, #tpu.memory_space<vmem>>, vector<1x1xf32>
      tpu.vector_store %arg3[%c0_17, %c0_18], %41 {strides = array<i32>} : memref<1x1xf32, #tpu.memory_space<vmem>>, vector<1x1xf32>,
    } else {
    }
    %c0 = arith.constant 0 : index
    %c0_1 = arith.constant 0 : index
    %3 = vector.load %arg1[%c0, %c0_1] : memref<8x200xbf16, #tpu.memory_space<vmem>>, vector<8x200xbf16>
    %4 = arith.extf %3 : vector<8x200xbf16> to vector<8x200xf32>
    %c0_2 = arith.constant 0 : index
    %c0_3 = arith.constant 0 : index
    %5 = vector.load %arg2[%c0_2, %c0_3] : memref<8x1xi32, #tpu.memory_space<vmem>>, vector<8x1xi32>
    %cst = arith.constant dense<0xFF800000> : vector<8xf32>
    %6 = vector.multi_reduction <maximumf>, %4, %cst [1] : vector<8x200xf32> to vector<8xf32>
    %7 = vector.shape_cast %6 : vector<8xf32> to vector<8x1xf32>
    %8 = vector.broadcast %7 : vector<8x1xf32> to vector<8x200xf32>
    %9 = arith.subf %4, %8 : vector<8x200xf32>
    %10 = math.exp %9 : vector<8x200xf32>
    %cst_4 = arith.constant dense<0.000000e+00> : vector<8xf32>
    %11 = vector.multi_reduction <add>, %10, %cst_4 [1] : vector<8x200xf32> to vector<8xf32>
    %12 = vector.shape_cast %11 : vector<8xf32> to vector<8x1xf32>
    %13 = tpu.iota {dimensions = array<i32: 1>} : vector<8x200xi32>
    %14 = vector.broadcast %5 : vector<8x1xi32> to vector<8x200xi32>
    %15 = arith.cmpi eq, %13, %14 : vector<8x200xi32>
    %cst_5 = arith.constant 0.000000e+00 : f32
    %16 = vector.broadcast %cst_5 : f32 to vector<8x200xf32>
    %17 = arith.select %15, %9, %16 : vector<8x200xi1>, vector<8x200xf32>
    %cst_6 = arith.constant dense<0.000000e+00> : vector<8xf32>
    %18 = vector.multi_reduction <add>, %17, %cst_6 [1] : vector<8x200xf32> to vector<8xf32>
    %19 = vector.shape_cast %18 : vector<8xf32> to vector<8x1xf32>
    %20 = math.log %12 : vector<8x1xf32>
    %21 = arith.subf %20, %19 : vector<8x1xf32>
    %22 = tpu.iota {dimensions = array<i32: 0>} : vector<8x1xi32>
    %c8_i32 = arith.constant 8 : i32
    %23 = arith.muli %arg0, %c8_i32 : i32
    %24 = vector.broadcast %23 : i32 to vector<8x1xi32>
    %25 = arith.addi %22, %24 : vector<8x1xi32>
    %c8_i32_7 = arith.constant 8 : i32
    %26 = vector.broadcast %c8_i32_7 : i32 to vector<8x1xi32>
    %27 = arith.cmpi slt, %25, %26 : vector<8x1xi32>
    %cst_8 = arith.constant 0.000000e+00 : f32
    %28 = vector.broadcast %cst_8 : f32 to vector<8x1xf32>
    %29 = arith.select %27, %21, %28 : vector<8x1xi1>, vector<8x1xf32>
    %c0_9 = arith.constant 0 : index
    %c0_10 = arith.constant 0 : index
    %30 = vector.load %arg3[%c0_9, %c0_10] : memref<1x1xf32, #tpu.memory_space<vmem>>, vector<1x1xf32>
    %31 = vector.shape_cast %29 : vector<8x1xf32> to vector<1x8x1xf32>
    %cst_11 = arith.constant dense<0.000000e+00> : vector<1xf32>
    %32 = vector.multi_reduction <add>, %31, %cst_11 [1, 2] : vector<1x8x1xf32> to vector<1xf32>
    %33 = vector.shape_cast %32 : vector<1xf32> to vector<1x1x1xf32>
    %34 = vector.extract %33[0, 0, 0] : f32 from vector<1x1x1xf32>
    %35 = vector.broadcast %34 : f32 to vector<1x1xf32>
    %36 = arith.addf %30, %35 : vector<1x1xf32>
    %c0_12 = arith.constant 0 : index
    %c0_13 = arith.constant 0 : index
    %37 = vector.load %arg3[%c0_12, %c0_13] : memref<1x1xf32, #tpu.memory_space<vmem>>, vector<1x1xf32>
    tpu.vector_store %arg3[%c0_12, %c0_13], %36 {strides = array<i32>} : memref<1x1xf32, #tpu.memory_space<vmem>>, vector<1x1xf32>,
    %c0_i32_14 = arith.constant 0 : i32
    %38 = arith.cmpi eq, %arg0, %c0_i32_14 : i32
    %39 = arith.extui %38 : i1 to i32
    %c0_i32_15 = arith.constant 0 : i32
    %40 = arith.cmpi ne, %39, %c0_i32_15 : i32
    scf.if %40 {
      %c0_16 = arith.constant 0 : index
      %c0_17 = arith.constant 0 : index
      %41 = vector.load %arg3[%c0_16, %c0_17] : memref<1x1xf32, #tpu.memory_space<vmem>>, vector<1x1xf32>
      %cst_18 = arith.constant 1.250000e-01 : f32
      %42 = vector.broadcast %cst_18 : f32 to vector<1x1xf32>
      %43 = arith.mulf %41, %42 : vector<1x1xf32>
      %c0_19 = arith.constant 0 : index
      %c0_20 = arith.constant 0 : index
      %44 = vector.load %arg3[%c0_19, %c0_20] : memref<1x1xf32, #tpu.memory_space<vmem>>, vector<1x1xf32>
      tpu.vector_store %arg3[%c0_19, %c0_20], %43 {strides = array<i32>} : memref<1x1xf32, #tpu.memory_space<vmem>>, vector<1x1xf32>,
    } else {
    }
    return
  }
  func.func @transform_0(%arg0: i32) -> (i32, i32) {
    %c0_i32 = arith.constant 0 : i32
    %c0_i32_0 = arith.constant 0 : i32
    return %arg0, %c0_i32 : i32, i32
  }
  func.func @transform_1(%arg0: i32) -> (i32, i32) {
    %c0_i32 = arith.constant 0 : i32
    %c0_i32_0 = arith.constant 0 : i32
    return %arg0, %c0_i32 : i32, i32
  }
  func.func @transform_2(%arg0: i32) -> (i32, i32) {
    %c0_i32 = arith.constant 0 : i32
    %c0_i32_0 = arith.constant 0 : i32
    %c0_i32_1 = arith.constant 0 : i32
    return %c0_i32, %c0_i32_0 : i32, i32
  }
}

</mosaic_0001>

<llo_original>
// kernel: criterion_forward.1
$region0: #{criterion_forward.1}
  #allocation0 [shape = 'u32[]', space=smem, size = 0x4, offset = 0x4, fixed_abs, tag = 'smem constant byte address 0x4 - core index']
  #allocation1 [shape = 'u32[144,128]{1,0:T(1,128)}', space=vmem, size = 0x12000, scoped, tag = 'internal scratch']
  %s0 = inlined_call_operand.vmem [shape: bf16[8,200], index: 0, kind: input, shape index: {}]
  %s1 = inlined_call_operand.vmem [shape: s32[8,1], index: 1, kind: input, shape index: {}]
  %s2 = inlined_call_operand.hbm [shape: f32[1,1], index: 2, kind: output, shape index: {}]
  %s3 = sld [smem:[#allocation0]]
  $region26: #{criterion_forward.1} parent=0
    _
  %s5 = ssub.s32 1, %s3
  %s6 = scalar_select 0, %s5, %s3
  $region1: #{criterion_forward.1} parent=0
    #allocation2 [shape = 'u8[512]{0}', space=vmem, size = 0x400, scoped, tag = 'output window, operand 0, single buffered']
    #allocation3 [shape = 's32[1]{0}', space=sflag, size = 0x4, scoped, tag = 'scoped memory for criterion_forward.1']
    %7 = vsyncpa [#allocation3], 0
    // Predicated region
    $region2: #{criterion_forward.1} parent=1 // pred_check
      _
    $region3: #{criterion_forward.1} parent=1 // pred_check_branch
      %9 = sbr.rel (0) target = $region5
    $region4: #{criterion_forward.1} parent=1 // pred_region
      _
    $region5: #{criterion_forward.1} parent=1 // pred_fallthru
      _
    // Predicated region
    $region6: #{criterion_forward.1} parent=1 // pred_check
      _
    $region7: #{criterion_forward.1} parent=1 // pred_check_branch
      %11 = sbr.rel (0) target = $region9
    $region8: #{criterion_forward.1} parent=1 // pred_region
      _
    $region9: #{criterion_forward.1} parent=1 // pred_fallthru
      _
    %p12 = scmp.eq.s32.totalorder 0, 0
    // Predicated region
    $region10: #{criterion_forward.1} parent=1 // pred_check
      %p13 = pneg %p12
    $region11: #{criterion_forward.1} parent=1 // pred_check_branch
      %15 = sbr.rel (%p13) target = $region13
    $region12: #{criterion_forward.1} parent=1 // pred_region
      %vm16 = vcmask 0
      %17 = vst.msk [vmem:[#allocation2] sm:$0x1] %vm16, 0.0
    $region13: #{criterion_forward.1} parent=1 // pred_fallthru
      _
    %v18 = vld [vmem:[%s0] sm:$0xff]
    %v19 = vunpack.c.l.bf16 %v18
    %v20 = vunpack.c.h.bf16 %v18
    %v21 = vld [vmem:[%s1] sm:$0xff]
    %vm22 = vcmask 588800
    %v23 = vsel %vm22, %v20, -inf
    %v24 = vmax.f32 %v19, %v23
    %25 = vmax.xlane.f32.xlu0 %v24
    %v26 = vpop.xlane.xlu0 %25
    %v27 = vsub.f32 %v19, %v26
    %v28 = vsub.f32 %v20, %v26
    %v29 = vmul.f32 %v27, 1.442695
    %v30 = vpow.pop %v29
    %v31 = vmul.f32 %v28, 1.442695
    %v32 = vpow.pop %v31
    %v33 = vsel %vm22, %v32, 0.0
    %v34 = vadd.f32 %v30, %v33
    %35 = vadd.xlane.f32.xlu0 %v34
    %v36 = vpop.xlane.xlu0 %35
    %v37 = vlaneseq
    %v38 = vand.u32 %v37, 127
    %v39 = vadd.s32 %v38, 128
    %40 = vset.pattern.permute.xlu0 0
    %41 = vperm.xlu0 %40, %v21
    %v42 = vpop.permute.xlu0 %41
    %vm43 = vcmp.eq.s32.totalorder %v38, %v42
    %vm44 = vcmp.eq.s32.totalorder %v39, %v42
    %v45 = vsel %vm43, %v27, 0.0
    %v46 = vsel %vm44, %v28, 0.0
    %v47 = vsel %vm22, %v46, 0.0
    %v48 = vadd.f32 %v45, %v47
    %49 = vadd.xlane.f32.xlu0 %v48
    %v50 = vpop.xlane.xlu0 %49
    %v51 = vlog2.pop %v36
    %v52 = vmul.f32 %v51, 0.6931472
    %v53 = vsub.f32 %v52, %v50
    %v54 = vlaneseq
    %v55 = vshrl.u32 %v54, 7
    %s56 = smul.u32 0, 8
    %v57 = vstv %s56
    %v58 = vadd.s32 %v55, %v57
    %vm59 = vcmp.lt.s32.totalorder %v58, 8
    %v60 = vsel %vm59, %v53, 0.0
    %v61 = vld [vmem:[#allocation2] sm:$0x1]
    %vm62 = vcmask 7168
    %v63 = vsel %vm62, %v60, 0.0
    %64 = vadd.xlane.f32.xlu0 %v63
    %v65 = vpop.xlane.xlu0 %64
    %v66 = vrot.slane %v65, 4
    %v67 = vadd.f32 %v65, %v66
    %v68 = vrot.slane %v67, 2
    %v69 = vadd.f32 %v67, %v68
    %v70 = vrot.slane %v69, 1
    %v71 = vadd.f32 %v69, %v70
    %s72 = vtos %v71
    %v73 = vstv %s72
    %v74 = vadd.f32 %v61, %v73
    %vm75 = vcmask 0
    %76 = vst.msk [vmem:[#allocation2] sm:$0x1] %vm75, %v74
    // Predicated region
    $region14: #{criterion_forward.1} parent=1 // pred_check
      %p77 = pneg %p12
    $region15: #{criterion_forward.1} parent=1 // pred_check_branch
      %79 = sbr.rel (%p77) target = $region17
    $region16: #{criterion_forward.1} parent=1 // pred_region
      %v80 = vld [vmem:[#allocation2] sm:$0x1]
      %v81 = vmul.f32 %v80, 0.125
      %82 = vst.msk [vmem:[#allocation2] sm:$0x1] %vm75, %v81
    $region17: #{criterion_forward.1} parent=1 // pred_fallthru
      _
    // Predicated region
    $region18: #{criterion_forward.1} parent=1 // pred_check
      _
    $region19: #{criterion_forward.1} parent=1 // pred_check_branch
      %84 = sbr.rel (0) target = $region21
    $region20: #{criterion_forward.1} parent=1 // pred_region
      %s86 = ssub.s32 16, 16
      %87 = vsyncadd [#allocation3], %s86
      %s89 = sshll.u32 [#allocation2], 4
      %s90 = int_to_ptr.vmem [resolvable:$true] %s89
      %92 = dma.vmem_to_hbm [thread:$0]  %s90, 16, %s2, [#allocation3]
    $region21: #{criterion_forward.1} parent=1 // pred_fallthru
      _
    // Predicated region
    $region22: #{criterion_forward.1} parent=1 // pred_check
      _
    $region23: #{criterion_forward.1} parent=1 // pred_check_branch
      %94 = sbr.rel (0) target = $region25
    $region24: #{criterion_forward.1} parent=1 // pred_region
      %95 = dma.done [#allocation3], 16
    $region25: #{criterion_forward.1} parent=1 // pred_fallthru
      _
    %96 = vsyncpa [#allocation3], 1

</llo_original>
